<compile_context>
chip_gen: v7x
topology: tpu7x:2x2x1
jax: 0.10.0
libtpu: 0.0.40
codegen_flags: <defaults>
</compile_context>

<pallas_src>
import functools

import jax
import jax.numpy as jnp
from jax import lax
from jax.experimental import pallas as pl
from jax.experimental.pallas import tpu as pltpu


def _round_up(x, m):
    return (x + m - 1) // m * m


def _round_down(x, m):
    return x // m * m


def _sublane_multiple(itemsize):
    # f32 -> 8, bf16 -> 16, int8/fp8 -> 32 (sub-32-bit dtypes pack along sublanes).
    return max(8, 32 // int(itemsize))


def _vmem_capacity_bytes(default=64 << 20):
    try:
        cap = getattr(pltpu.get_tpu_info(), "vmem_capacity_bytes", None)
        if cap:
            return int(cap)
    except Exception:
        pass
    return default  # conservative fallback: v7x per-TensorCore VMEM


def _adain_rows_kernel(x_ref, w_ref, b_ref, o_ref, *, eps, inv_hw):
    """Fast path: each block is (tile_r, HW), i.e. full spatial extent per row."""
    # Pass 1: mean (f32 accumulation; cast fused per-vreg, no full-tile f32 temp).
    mean = jnp.sum(x_ref[...].astype(jnp.float32), axis=-1, keepdims=True) * inv_hw
    # Pass 2: two-pass (centered) variance -- avoids E[x^2]-E[x]^2 cancellation.
    centered = x_ref[...].astype(jnp.float32) - mean
    var = jnp.sum(centered * centered, axis=-1, keepdims=True) * inv_hw
    # Fold normalization + affine into a single per-row scale/shift pair.
    scale = lax.rsqrt(var + eps) * w_ref[...].astype(jnp.float32)
    shift = b_ref[...].astype(jnp.float32) - mean * scale
    # Pass 3: fused write -- exactly one multiply + one add per element.
    o_ref[...] = (x_ref[...].astype(jnp.float32) * scale + shift).astype(o_ref.dtype)


def _adain_split_kernel(x_ref, w_ref, b_ref, o_ref, s_ref, s2_ref, *,
                        eps, inv_hw, hw, tile_hw, mask_cols):
    """Large-HW fallback: grid = (row_tiles, 2 phases, hw_tiles)."""
    p = pl.program_id(1)
    j = pl.program_id(2)

    @pl.when((p == 0) & (j == 0))
    def _():
        s_ref[...] = jnp.zeros_like(s_ref)
        s2_ref[...] = jnp.zeros_like(s2_ref)

    @pl.when(p == 0)
    def _():
        xf = x_ref[...].astype(jnp.float32)
        if mask_cols:  # ragged last HW tile: zero out-of-bounds lanes in the stats
            col = j * tile_hw + lax.broadcasted_iota(jnp.int32, xf.shape, 1)
            xf = jnp.where(col < hw, xf, 0.0)
        s_ref[...] += jnp.sum(xf, axis=-1, keepdims=True)
        s2_ref[...] += jnp.sum(xf * xf, axis=-1, keepdims=True)

    @pl.when(p == 1)
    def _():
        mean = s_ref[...] * inv_hw
        var = jnp.maximum(s2_ref[...] * inv_hw - mean * mean, 0.0)
        scale = lax.rsqrt(var + eps) * w_ref[...].astype(jnp.float32)
        shift = b_ref[...].astype(jnp.float32) - mean * scale
        o_ref[...] = (x_ref[...].astype(jnp.float32) * scale + shift).astype(o_ref.dtype)


def adaptive_instance_norm_2d_b(x, weight, bias, *, eps=1e-5, momentum=0.1,
                                _force_hw_tile=None):
    """x: (B, C, H, W); weight, bias: (C,). Returns (B, C, H, W)."""
    del momentum  # running stats are None -> momentum has no effect on forward
    B, C, H, W = x.shape
    assert weight.shape == (C,) and bias.shape == (C,)
    HW = H * W
    R = B * C

    x2d = x.reshape(R, HW)
    # Per-row affine params: row r = b*C + c uses weight[c], bias[c].
    w_rows = jnp.tile(weight.astype(jnp.float32), B).reshape(R, 1)
    b_rows = jnp.tile(bias.astype(jnp.float32), B).reshape(R, 1)

    itemsize = jnp.dtype(x.dtype).itemsize
    sub = _sublane_multiple(itemsize)
    eps = float(eps)
    inv_hw = 1.0 / float(HW)

    # Generation-aware VMEM budget (128 MiB parts -> ~70 MiB limit / ~16 MiB
    # blocks; 64 MiB v7x -> ~35 MiB limit / ~7 MiB blocks).
    vmem_limit = max(32 << 20, min(int(0.55 * _vmem_capacity_bytes()), 96 << 20))
    budget = vmem_limit - (6 << 20)  # headroom for Mosaic-internal scratch

    # Per-row VMEM cost on the fast path: double-buffered in + out rows, plus
    # the lane-padded (tile_r, 1)->(tile_r, 128) f32 weight/bias blocks (x2 buf).
    row_bytes_full = 4 * HW * itemsize + 4 * 128 * 4
    min_rows = min(sub, R)

    if _force_hw_tile is None and min_rows * row_bytes_full <= budget:
        # -------- fast path: one (tile_r, HW) block per grid step -----------
        by_budget = max(sub, _round_down(budget // row_bytes_full, sub))
        by_steps = max(sub, _round_up(-(-R // 8), sub))  # aim for ~8 grid steps
        tile_r = min(by_budget, by_steps)
        if tile_r >= R:
            tile_r = R  # single full-extent block (full-dim exception)
        grid = (pl.cdiv(R, tile_r),)

        kernel = functools.partial(_adain_rows_kernel, eps=eps, inv_hw=inv_hw)
        out2d = pl.pallas_call(
            kernel,
            out_shape=jax.ShapeDtypeStruct((R, HW), x.dtype),
            grid_spec=pltpu.PrefetchScalarGridSpec(
                num_scalar_prefetch=0,
                grid=grid,
                in_specs=[
                    pl.BlockSpec((tile_r, HW), lambda i: (i, 0)),
                    pl.BlockSpec((tile_r, 1), lambda i: (i, 0)),
                    pl.BlockSpec((tile_r, 1), lambda i: (i, 0)),
                ],
                out_specs=pl.BlockSpec((tile_r, HW), lambda i: (i, 0)),
            ),
            compiler_params=pltpu.CompilerParams(
                dimension_semantics=("parallel",),
                vmem_limit_bytes=vmem_limit,
            ),
        )(x2d, w_rows, b_rows)
    else:
        # -------- large-HW fallback: split the spatial axis -----------------
        tile_r = min(sub, R)
        if _force_hw_tile is not None:
            tile_hw = int(_force_hw_tile)
        else:
            tile_hw = _round_down(
                (budget - tile_r * 4 * 128 * 4) // (4 * tile_r * itemsize), 128)
        tile_hw = max(128, min(tile_hw, _round_down(max(HW, 128), 128)))
        mask_cols = (HW % tile_hw) != 0
        grid = (pl.cdiv(R, tile_r), 2, pl.cdiv(HW, tile_hw))

        kernel = functools.partial(
            _adain_split_kernel, eps=eps, inv_hw=inv_hw,
            hw=HW, tile_hw=tile_hw, mask_cols=mask_cols)
        out2d = pl.pallas_call(
            kernel,
            out_shape=jax.ShapeDtypeStruct((R, HW), x.dtype),
            grid_spec=pltpu.PrefetchScalarGridSpec(
                num_scalar_prefetch=0,
                grid=grid,
                in_specs=[
                    pl.BlockSpec((tile_r, tile_hw), lambda i, p, j: (i, j)),
                    pl.BlockSpec((tile_r, 1), lambda i, p, j: (i, 0)),
                    pl.BlockSpec((tile_r, 1), lambda i, p, j: (i, 0)),
                ],
                # (i, j*p): during phase 0 the output index stays at (i, 0), so
                # no output block is copied out before phase 1 has written it.
                out_specs=pl.BlockSpec((tile_r, tile_hw), lambda i, p, j: (i, j * p)),
                scratch_shapes=[
                    pltpu.VMEM((tile_r, 1), jnp.float32),
                    pltpu.VMEM((tile_r, 1), jnp.float32),
                ],
            ),
            compiler_params=pltpu.CompilerParams(
                dimension_semantics=("parallel", "arbitrary", "arbitrary"),
                vmem_limit_bytes=vmem_limit,
            ),
        )(x2d, w_rows, b_rows)

    return out2d.reshape(B, C, H, W)


def _reference(x, weight, bias, eps=1e-5):
    xf = x.astype(jnp.float32)
    mean = jnp.mean(xf, axis=(2, 3), keepdims=True)
    var = jnp.mean(jnp.square(xf - mean), axis=(2, 3), keepdims=True)
    y = (xf - mean) / jnp.sqrt(var + eps)
    return (y * weight[None, :, None, None] + bias[None, :, None, None]).astype(x.dtype)


if __name__ == "__main__":
    key = jax.random.PRNGKey(0)
    kx, kw, kb, kx2 = jax.random.split(key, 4)

    B, C, H, W = 2, 4, 16, 16
    # Non-zero mean offset exercises the two-pass variance robustness.
    x = jax.random.normal(kx, (B, C, H, W), dtype=jnp.float32) * 2.0 + 3.0
    # Parameters the user would assign before calling AdaIN (module init leaves
    # them None); shapes are (num_features,) = (C,).
    weight = jax.random.normal(kw, (C,), dtype=jnp.float32)
    bias = jax.random.normal(kb, (C,), dtype=jnp.float32)

    out = jax.block_until_ready(adaptive_instance_norm_2d_b(x, weight, bias, eps=1e-5))
    ref = _reference(x, weight, bias, eps=1e-5)
    assert out.shape == (B, C, H, W)
    assert jnp.allclose(out, ref, atol=1e-4, rtol=1e-4), "fast path mismatch"

    # Also exercise the large-HW fallback (forced small spatial tile) on a
    # ragged spatial size so the in-kernel lane masking path is covered.
    H2, W2 = 16, 10
    x2 = jax.random.normal(kx2, (B, C, H2, W2), dtype=jnp.float32) * 0.5 - 1.0
    out2 = jax.block_until_ready(
        adaptive_instance_norm_2d_b(x2, weight, bias, eps=1e-5, _force_hw_tile=128))
    ref2 = _reference(x2, weight, bias, eps=1e-5)
    assert jnp.allclose(out2, ref2, atol=1e-4, rtol=1e-4), "split path mismatch"

    print("KERNEL_OK")
</pallas_src>

<mosaic_0001>
module attributes {stable_mosaic.version = 11 : i64} {
  func.func @_adain_rows_kernel(%arg0: i32, %arg1: memref<8x256xf32, #tpu.memory_space<vmem>>, %arg2: memref<8x1xf32, #tpu.memory_space<vmem>>, %arg3: memref<8x1xf32, #tpu.memory_space<vmem>>, %arg4: memref<8x256xf32, #tpu.memory_space<vmem>>) attributes {dimension_semantics = [#tpu.dimension_semantics<parallel>], iteration_bounds = array<i64: 1>, scalar_prefetch = 0 : i64, scratch_operands = 0 : i64, tpu.core_type = #tpu.core_type<tc>, window_params = [{transform_indices = @transform_0, window_bounds = array<i64: 8, 256>}, {transform_indices = @transform_1, window_bounds = array<i64: 8, 1>}, {transform_indices = @transform_2, window_bounds = array<i64: 8, 1>}, {transform_indices = @transform_3, window_bounds = array<i64: 8, 256>}]} {
    %c0 = arith.constant 0 : index
    %c0_0 = arith.constant 0 : index
    %0 = vector.load %arg1[%c0, %c0_0] : memref<8x256xf32, #tpu.memory_space<vmem>>, vector<8x256xf32>
    %cst = arith.constant dense<0.000000e+00> : vector<8xf32>
    %1 = vector.multi_reduction <add>, %0, %cst [1] : vector<8x256xf32> to vector<8xf32>
    %2 = vector.shape_cast %1 : vector<8xf32> to vector<8x1xf32>
    %cst_1 = arith.constant 3.906250e-03 : f32
    %3 = vector.broadcast %cst_1 : f32 to vector<8x1xf32>
    %4 = arith.mulf %2, %3 : vector<8x1xf32>
    %c0_2 = arith.constant 0 : index
    %c0_3 = arith.constant 0 : index
    %5 = vector.load %arg1[%c0_2, %c0_3] : memref<8x256xf32, #tpu.memory_space<vmem>>, vector<8x256xf32>
    %6 = vector.broadcast %4 : vector<8x1xf32> to vector<8x256xf32>
    %7 = arith.subf %5, %6 : vector<8x256xf32>
    %8 = arith.mulf %7, %7 : vector<8x256xf32>
    %cst_4 = arith.constant dense<0.000000e+00> : vector<8xf32>
    %9 = vector.multi_reduction <add>, %8, %cst_4 [1] : vector<8x256xf32> to vector<8xf32>
    %10 = vector.shape_cast %9 : vector<8xf32> to vector<8x1xf32>
    %cst_5 = arith.constant 3.906250e-03 : f32
    %11 = vector.broadcast %cst_5 : f32 to vector<8x1xf32>
    %12 = arith.mulf %10, %11 : vector<8x1xf32>
    %cst_6 = arith.constant 9.99999974E-6 : f32
    %13 = vector.broadcast %cst_6 : f32 to vector<8x1xf32>
    %14 = arith.addf %12, %13 : vector<8x1xf32>
    %15 = math.rsqrt %14 : vector<8x1xf32>
    %c0_7 = arith.constant 0 : index
    %c0_8 = arith.constant 0 : index
    %16 = vector.load %arg2[%c0_7, %c0_8] : memref<8x1xf32, #tpu.memory_space<vmem>>, vector<8x1xf32>
    %17 = arith.mulf %15, %16 : vector<8x1xf32>
    %c0_9 = arith.constant 0 : index
    %c0_10 = arith.constant 0 : index
    %18 = vector.load %arg3[%c0_9, %c0_10] : memref<8x1xf32, #tpu.memory_space<vmem>>, vector<8x1xf32>
    %19 = arith.mulf %4, %17 : vector<8x1xf32>
    %20 = arith.subf %18, %19 : vector<8x1xf32>
    %c0_11 = arith.constant 0 : index
    %c0_12 = arith.constant 0 : index
    %21 = vector.load %arg1[%c0_11, %c0_12] : memref<8x256xf32, #tpu.memory_space<vmem>>, vector<8x256xf32>
    %22 = vector.broadcast %17 : vector<8x1xf32> to vector<8x256xf32>
    %23 = arith.mulf %21, %22 : vector<8x256xf32>
    %24 = vector.broadcast %20 : vector<8x1xf32> to vector<8x256xf32>
    %25 = arith.addf %23, %24 : vector<8x256xf32>
    %c0_13 = arith.constant 0 : index
    %c0_14 = arith.constant 0 : index
    %26 = vector.load %arg4[%c0_13, %c0_14] : memref<8x256xf32, #tpu.memory_space<vmem>>, vector<8x256xf32>
    tpu.vector_store %arg4[%c0_13, %c0_14], %25 {strides = array<i32>} : memref<8x256xf32, #tpu.memory_space<vmem>>, vector<8x256xf32>,
    return
  }
  func.func @transform_0(%arg0: i32) -> (i32, i32) {
    %c0_i32 = arith.constant 0 : i32
    %c0_i32_0 = arith.constant 0 : i32
    return %arg0, %c0_i32 : i32, i32
  }
  func.func @transform_1(%arg0: i32) -> (i32, i32) {
    %c0_i32 = arith.constant 0 : i32
    %c0_i32_0 = arith.constant 0 : i32
    return %arg0, %c0_i32 : i32, i32
  }
  func.func @transform_2(%arg0: i32) -> (i32, i32) {
    %c0_i32 = arith.constant 0 : i32
    %c0_i32_0 = arith.constant 0 : i32
    return %arg0, %c0_i32 : i32, i32
  }
  func.func @transform_3(%arg0: i32) -> (i32, i32) {
    %c0_i32 = arith.constant 0 : i32
    %c0_i32_0 = arith.constant 0 : i32
    return %arg0, %c0_i32 : i32, i32
  }
}

</mosaic_0001>

<llo_original>
// kernel: tpu_custom_call.1
$region0: #{tpu_custom_call.1}
  #allocation0 [shape = 'u32[]', space=smem, size = 0x4, offset = 0x4, fixed_abs, tag = 'smem constant byte address 0x4 - core index']
  #allocation1 [shape = 'u32[144,128]{1,0:T(1,128)}', space=vmem, size = 0x12000, scoped, tag = 'internal scratch']
  %s0 = inlined_call_operand.vmem [shape: f32[8,256], index: 0, kind: input, shape index: {}]
  %s1 = inlined_call_operand.vmem [shape: f32[8,1], index: 1, kind: input, shape index: {}]
  %s2 = inlined_call_operand.vmem [shape: f32[8,1], index: 2, kind: input, shape index: {}]
  %s3 = inlined_call_operand.hbm [shape: f32[8,256], index: 3, kind: output, shape index: {}]
  %s4 = sld [smem:[#allocation0]]
  $region22: #{tpu_custom_call.1} parent=0
    _
  %s6 = ssub.s32 1, %s4
  %s7 = scalar_select 0, %s6, %s4
  $region1: #{tpu_custom_call.1} parent=0
    #allocation2 [shape = 'u8[8192]{0}', space=vmem, size = 0x2000, scoped, tag = 'output window, operand 0, single buffered']
    #allocation3 [shape = 's32[1]{0}', space=sflag, size = 0x4, scoped, tag = 'scoped memory for tpu_custom_call.1']
    %8 = vsyncpa [#allocation3], 0
    // Predicated region
    $region2: #{tpu_custom_call.1} parent=1 // pred_check
      _
    $region3: #{tpu_custom_call.1} parent=1 // pred_check_branch
      %10 = sbr.rel (0) target = $region5
    $region4: #{tpu_custom_call.1} parent=1 // pred_region
      _
    $region5: #{tpu_custom_call.1} parent=1 // pred_fallthru
      _
    // Predicated region
    $region6: #{tpu_custom_call.1} parent=1 // pred_check
      _
    $region7: #{tpu_custom_call.1} parent=1 // pred_check_branch
      %12 = sbr.rel (0) target = $region9
    $region8: #{tpu_custom_call.1} parent=1 // pred_region
      _
    $region9: #{tpu_custom_call.1} parent=1 // pred_fallthru
      _
    // Predicated region
    $region10: #{tpu_custom_call.1} parent=1 // pred_check
      _
    $region11: #{tpu_custom_call.1} parent=1 // pred_check_branch
      %14 = sbr.rel (0) target = $region13
    $region12: #{tpu_custom_call.1} parent=1 // pred_region
      _
    $region13: #{tpu_custom_call.1} parent=1 // pred_fallthru
      _
    %v15 = vld [vmem:[%s0] sm:$0xff]
    %v16 = vld [vmem:[%s0 + $0x8] sm:$0xff]
    %v17 = vadd.f32 %v15, %v16
    %18 = vadd.xlane.f32.xlu0 %v17
    %v19 = vpop.xlane.xlu0 %18
    %v20 = vmul.f32 %v19, 0.00390625
    %v21 = vsub.f32 %v15, %v20
    %v22 = vsub.f32 %v16, %v20
    %v23 = vmul.f32 %v21, %v21
    %v24 = vmul.f32 %v22, %v22
    %v25 = vadd.f32 %v23, %v24
    %26 = vadd.xlane.f32.xlu0 %v25
    %v27 = vpop.xlane.xlu0 %26
    %v28 = vmul.f32 %v27, 0.00390625
    %v29 = vadd.f32 %v28, 1e-05
    %v30 = vrsqrt.pop %v29
    %v31 = vld [vmem:[%s1] sm:$0xff]
    %v32 = vmul.f32 %v30, %v31
    %v33 = vld [vmem:[%s2] sm:$0xff]
    %v34 = vmul.f32 %v20, %v32
    %v35 = vsub.f32 %v33, %v34
    %37 = vset.pattern.permute.xlu0 0
    %38 = vperm.xlu0 %37, %v32
    %v39 = vpop.permute.xlu0 %38
    %v41 = vmul.f32 %v15, %v39
    %v42 = vmul.f32 %v16, %v39
    %44 = vset.pattern.permute.xlu0 0
    %45 = vperm.xlu0 %44, %v35
    %v46 = vpop.permute.xlu0 %45
    %v48 = vadd.f32 %v41, %v46
    %v49 = vadd.f32 %v42, %v46
    %50 = vst [vmem:[#allocation2] sm:$0xff] %v48
    %51 = vst [vmem:[#allocation2 + $0x8] sm:$0xff] %v49
    // Predicated region
    $region14: #{tpu_custom_call.1} parent=1 // pred_check
      _
    $region15: #{tpu_custom_call.1} parent=1 // pred_check_branch
      %53 = sbr.rel (0) target = $region17
    $region16: #{tpu_custom_call.1} parent=1 // pred_region
      %s55 = ssub.s32 256, 256
      %56 = vsyncadd [#allocation3], %s55
      %s58 = sshll.u32 [#allocation2], 4
      %s59 = int_to_ptr.vmem [resolvable:$true] %s58
      %61 = dma.vmem_to_hbm [thread:$0]  %s59, 256, %s3, [#allocation3]
    $region17: #{tpu_custom_call.1} parent=1 // pred_fallthru
      _
    // Predicated region
    $region18: #{tpu_custom_call.1} parent=1 // pred_check
      _
    $region19: #{tpu_custom_call.1} parent=1 // pred_check_branch
      %63 = sbr.rel (0) target = $region21
    $region20: #{tpu_custom_call.1} parent=1 // pred_region
      %64 = dma.done [#allocation3], 256
    $region21: #{tpu_custom_call.1} parent=1 // pred_fallthru
      _
    %65 = vsyncpa [#allocation3], 1

</llo_original>
